<compile_context>
chip_gen: v6e
topology: v6e:2x2x1
jax: 0.10.0
libtpu: 0.0.40
codegen_flags: <defaults>
</compile_context>

<pallas_src>
import functools

import jax
import jax.numpy as jnp
from jax.experimental import pallas as pl
from jax.experimental.pallas import tpu as pltpu


def _round_up(n, m):
    return ((n + m - 1) // m) * m


def _cdiv(a, b):
    return -(-a // b)


def _physical_vmem_bytes():
    try:
        return int(pltpu.get_tpu_info().vmem_capacity_bytes)
    except Exception:
        return 64 << 20  # conservative: v7x has 64 MiB per TensorCore


def _mlp_kernel(num_hidden, x_ref, *refs):
    """Fused MLP kernel for one batch tile.

    refs = (w1_ref, b1_ref, ..., wL_ref, bL_ref,   # hidden Linear+ReLU layers
            wo_ref, bo_ref,                        # output Linear
            out_ref)
    x tile is f32, weights are bf16, biases f32, output tile bf16.
    """
    out_ref = refs[-1]
    param_refs = refs[:-1]

    h = x_ref[...].astype(jnp.bfloat16)           # f32 -> bf16 on the VPU
    for layer in range(num_hidden):
        w = param_refs[2 * layer][...]            # bf16 (in_dim, h_pad)
        b = param_refs[2 * layer + 1][...]        # f32  (1, h_pad)
        acc = jnp.dot(h, w, preferred_element_type=jnp.float32)   # MXU, f32 acc
        acc = jnp.maximum(acc + b, 0.0)           # bias add + ReLU in f32 (VPU)
        h = acc.astype(jnp.bfloat16)              # bf16 between layers
    wo = param_refs[2 * num_hidden][...]          # bf16 (h_pad, n_pad)
    bo = param_refs[2 * num_hidden + 1][...]      # f32  (1, n_pad)
    out = jnp.dot(h, wo, preferred_element_type=jnp.float32) + bo
    out_ref[...] = out.astype(out_ref.dtype)      # lane-dense bf16 store


def _replicated_spec(shape, single_buffer):
    """Full-array block mapped to block (0,...,0) for every grid step."""
    nd = len(shape)
    idx = lambda i, _nd=nd: (0,) * _nd            # capture ndim (late-binding safe)
    if single_buffer:
        # Constant index_map => never re-fetched; single-buffer to halve its
        # VMEM footprint.
        return pl.BlockSpec(shape, idx, pipeline_mode=pl.Buffered(1))
    return pl.BlockSpec(shape, idx)


class MLPPallas:
    """Mirror of the PyTorch MLP module, executed with a fused Pallas kernel."""

    def __init__(self, nb_classes=10, hid_nodes=400, hid_layers=2,
                 down_sample=1, input_size=28, key=None):
        if down_sample < 1:
            raise ValueError(f"down_sample should be 1 or greater, got {down_sample}")
        if hid_layers < 1:
            raise ValueError(f"hid_layers should be 1 or greater, got {hid_layers}")
        self.down_sample = down_sample
        spatial = input_size // down_sample
        self.input_size = spatial * spatial
        self.hid_nodes = hid_nodes
        self.hid_layers = hid_layers
        self.nb_classes = nb_classes

        # Lane-aligned (padded) output dims of each Linear; the input feature
        # dim of the first layer stays unpadded (full-extent block).
        self.h_pad = _round_up(hid_nodes, 128)
        self.n_pad = _round_up(nb_classes, 128)

        self._single_buffer_ok = None  # decided lazily on the first call

        if key is None:
            key = jax.random.PRNGKey(0)

        # nn.Linear default init: U(-1/sqrt(fan_in), 1/sqrt(fan_in)); the real
        # (fan_in, fan_out) block is initialized, padding is zero so the padded
        # matmuls are exact (ReLU(0)=0 propagates zeros through zero rows).
        def linear_init(k, fan_in, fan_out, in_dim, out_dim):
            kw, kb = jax.random.split(k)
            bound = 1.0 / (fan_in ** 0.5)
            w = jax.random.uniform(kw, (fan_in, fan_out), jnp.float32, -bound, bound)
            b = jax.random.uniform(kb, (1, fan_out), jnp.float32, -bound, bound)
            w_pad = jnp.zeros((in_dim, out_dim), jnp.float32).at[:fan_in, :fan_out].set(w)
            b_pad = jnp.zeros((1, out_dim), jnp.float32).at[:, :fan_out].set(b)
            # Weights in bf16 for the MXU; biases stay f32 for the VPU epilogue.
            return w_pad.astype(jnp.bfloat16), b_pad

        keys = jax.random.split(key, hid_layers + 1)
        self.params = []
        fan_in, in_dim = self.input_size, self.input_size
        for li in range(hid_layers):
            w, b = linear_init(keys[li], fan_in, hid_nodes, in_dim, self.h_pad)
            self.params.extend([w, b])
            fan_in, in_dim = hid_nodes, self.h_pad
        wo, bo = linear_init(keys[-1], hid_nodes, nb_classes, self.h_pad, self.n_pad)
        self.params.extend([wo, bo])

    # ---- plain-JAX glue ---------------------------------------------------
    def _maybe_downsample(self, x):
        # x: (B, C, H, W) NCHW.  MaxPool2d(k) with stride k == reshape-max.
        if self.down_sample > 1:
            b, c, h, w = x.shape
            k = self.down_sample
            x = x[:, :, : (h // k) * k, : (w // k) * k]
            x = x.reshape(b, c, h // k, k, w // k, k)
            x = jnp.max(x, axis=(3, 5))
        return x

    def _choose_tm(self, batch):
        # Small batches: single tile rounded to the f32 sublane multiple.
        if batch <= 16:
            return _round_up(batch, 8)
        # Otherwise: >= 2 grid steps (both v7x TensorCores busy), <= 2048 rows
        # per step, tile derived from the batch so padding waste is < 16 rows.
        n_steps = max(2, _cdiv(batch, 2048))
        return _round_up(_cdiv(batch, n_steps), 16)

    def _vmem_limit_bytes(self, tm, single_buffer_weights):
        param_bytes = sum(int(p.size) * p.dtype.itemsize for p in self.params)
        w_mult = 1 if single_buffer_weights else 2
        x_bytes = 2 * tm * self.input_size * 4          # f32 x tile, double-buffered
        out_bytes = 2 * tm * self.n_pad * 2             # bf16 out tile, double-buffered
        act_bytes = 3 * tm * max(self.input_size, self.h_pad, self.n_pad) * 4
        total = w_mult * param_bytes + x_bytes + out_bytes + act_bytes + (8 << 20)
        cap = int(0.75 * _physical_vmem_bytes())        # ~48 MiB v7x, ~96 MiB v5e/v6e
        return max(min(total, cap), 16 << 20)

    # ---- forward ----------------------------------------------------------
    @functools.partial(jax.jit, static_argnums=(0, 2))
    def _forward(self, x, single_buffer_weights):
        x = self._maybe_downsample(x)
        x2d = x.reshape(-1, self.input_size)            # == torch .view(-1, input_size)
        batch = x2d.shape[0]

        tm = self._choose_tm(batch)
        grid = _cdiv(batch, tm)                         # boundary tile masked by Pallas

        kernel = functools.partial(_mlp_kernel, self.hid_layers)

        # x: batch-tiled, full-extent (unpadded) feature dim -> no pre-pass.
        in_specs = [pl.BlockSpec((tm, self.input_size), lambda i: (i, 0))]
        for p in self.params:
            in_specs.append(_replicated_spec(p.shape, single_buffer_weights))
        out_spec = pl.BlockSpec((tm, self.n_pad), lambda i: (i, 0))

        out = pl.pallas_call(
            kernel,
            out_shape=jax.ShapeDtypeStruct((batch, self.n_pad), jnp.bfloat16),
            grid=(grid,),
            in_specs=in_specs,
            out_specs=out_spec,
            compiler_params=pltpu.CompilerParams(
                dimension_semantics=("parallel",),
                vmem_limit_bytes=self._vmem_limit_bytes(tm, single_buffer_weights),
            ),
        )(x2d, *self.params)
        # Strip lane padding; return f32 logits like the PyTorch module.
        return out[:, :self.nb_classes].astype(jnp.float32)

    def __call__(self, x):
        # Prefer single-buffered resident weights; fall back to default
        # (double-buffered) BlockSpecs if this JAX build rejects
        # pipeline_mode / Buffered(1).
        if self._single_buffer_ok is None:
            try:
                out = self._forward(x, True)
                self._single_buffer_ok = True
                return out
            except Exception:
                self._single_buffer_ok = False
        return self._forward(x, self._single_buffer_ok)


def _reference_forward(model: MLPPallas, x):
    """Pure-JAX reference mirroring the kernel math (bf16 operands, f32 acc,
    bf16 output rounding)."""
    x = model._maybe_downsample(x)
    h = x.reshape(-1, model.input_size).astype(jnp.bfloat16)
    for li in range(model.hid_layers):
        w = model.params[2 * li]
        b = model.params[2 * li + 1]
        acc = jnp.dot(h, w, preferred_element_type=jnp.float32) + b
        h = jnp.maximum(acc, 0.0).astype(jnp.bfloat16)
    wo = model.params[2 * model.hid_layers]
    bo = model.params[2 * model.hid_layers + 1]
    out = jnp.dot(h, wo, preferred_element_type=jnp.float32) + bo
    out = out.astype(jnp.bfloat16).astype(jnp.float32)
    return out[:, :model.nb_classes]


if __name__ == "__main__":
    key = jax.random.PRNGKey(0)
    kx, kp1, kp2, kp3, kx3 = jax.random.split(key, 5)

    # Small MNIST-like shapes: batch=8, 1 channel, 16x16 -> 256 features.
    batch, channels, hw = 8, 1, 16
    x = jax.random.normal(kx, (batch, channels, hw, hw), jnp.float32)

    model = MLPPallas(nb_classes=10, hid_nodes=128, hid_layers=2,
                      down_sample=1, input_size=hw, key=kp1)
    out = jax.block_until_ready(model(x))
    ref = _reference_forward(model, x)
    assert out.shape == (batch, 10), out.shape
    assert jnp.allclose(out, ref, atol=2e-2, rtol=2e-2), \
        float(jnp.max(jnp.abs(out - ref)))

    # Down-sampling path (MaxPool2d(2): 16x16 -> 8x8 = 64 features).
    model_ds = MLPPallas(nb_classes=10, hid_nodes=64, hid_layers=1,
                         down_sample=2, input_size=hw, key=kp2)
    out_ds = jax.block_until_ready(model_ds(x))
    ref_ds = _reference_forward(model_ds, x)
    assert out_ds.shape == (batch, 10), out_ds.shape
    assert jnp.allclose(out_ds, ref_ds, atol=2e-2, rtol=2e-2), \
        float(jnp.max(jnp.abs(out_ds - ref_ds)))

    # Multi-step grid path (batch=32 -> two batch tiles of 16) with ragged
    # hidden / class dims (400 -> padded 512, 10 -> padded 128).
    batch3 = 32
    x3 = jax.random.normal(kx3, (batch3, channels, hw, hw), jnp.float32)
    model3 = MLPPallas(nb_classes=10, hid_nodes=400, hid_layers=2,
                       down_sample=1, input_size=hw, key=kp3)
    out3 = jax.block_until_ready(model3(x3))
    ref3 = _reference_forward(model3, x3)
    assert out3.shape == (batch3, 10), out3.shape
    assert jnp.allclose(out3, ref3, atol=2e-2, rtol=2e-2), \
        float(jnp.max(jnp.abs(out3 - ref3)))

    print("KERNEL_OK")
</pallas_src>

<mosaic_0001>
module attributes {stable_mosaic.version = 11 : i64} {
  func.func @_mlp_kernel(%arg0: i32, %arg1: memref<8x256xf32, #tpu.memory_space<vmem>>, %arg2: memref<256x128xbf16, #tpu.memory_space<vmem>>, %arg3: memref<1x128xf32, #tpu.memory_space<vmem>>, %arg4: memref<128x128xbf16, #tpu.memory_space<vmem>>, %arg5: memref<1x128xf32, #tpu.memory_space<vmem>>, %arg6: memref<128x128xbf16, #tpu.memory_space<vmem>>, %arg7: memref<1x128xf32, #tpu.memory_space<vmem>>, %arg8: memref<8x128xbf16, #tpu.memory_space<vmem>>) attributes {dimension_semantics = [#tpu.dimension_semantics<parallel>], iteration_bounds = array<i64: 1>, scalar_prefetch = 0 : i64, scratch_operands = 0 : i64, tpu.core_type = #tpu.core_type<tc>, window_params = [{transform_indices = @transform_0, window_bounds = array<i64: 8, 256>}, {pipeline_mode = #tpu.pipeline_mode<synchronous>, transform_indices = @transform_1, window_bounds = array<i64: 256, 128>}, {pipeline_mode = #tpu.pipeline_mode<synchronous>, transform_indices = @transform_2, window_bounds = array<i64: 1, 128>}, {pipeline_mode = #tpu.pipeline_mode<synchronous>, transform_indices = @transform_3, window_bounds = array<i64: 128, 128>}, {pipeline_mode = #tpu.pipeline_mode<synchronous>, transform_indices = @transform_4, window_bounds = array<i64: 1, 128>}, {pipeline_mode = #tpu.pipeline_mode<synchronous>, transform_indices = @transform_5, window_bounds = array<i64: 128, 128>}, {pipeline_mode = #tpu.pipeline_mode<synchronous>, transform_indices = @transform_6, window_bounds = array<i64: 1, 128>}, {transform_indices = @transform_7, window_bounds = array<i64: 8, 128>}]} {
    %c0 = arith.constant 0 : index
    %c0_0 = arith.constant 0 : index
    %0 = vector.load %arg1[%c0, %c0_0] : memref<8x256xf32, #tpu.memory_space<vmem>>, vector<8x256xf32>
    %1 = arith.truncf %0 : vector<8x256xf32> to vector<8x256xbf16>
    %c0_1 = arith.constant 0 : index
    %c0_2 = arith.constant 0 : index
    %2 = vector.load %arg2[%c0_1, %c0_2] : memref<256x128xbf16, #tpu.memory_space<vmem>>, vector<256x128xbf16>
    %c0_3 = arith.constant 0 : index
    %c0_4 = arith.constant 0 : index
    %3 = vector.load %arg3[%c0_3, %c0_4] : memref<1x128xf32, #tpu.memory_space<vmem>>, vector<1x128xf32>
    %cst = arith.constant dense<0.000000e+00> : vector<8x128xf32>
    %4 = tpu.matmul %1, %2, %cst {dimension_numbers = #tpu.dot_dimension_numbers<[1], [0], [0], [1], [0, 0, 1, 1], [], []>} : vector<8x256xbf16>, vector<256x128xbf16>, vector<8x128xf32> -> vector<8x128xf32>
    %5 = vector.broadcast %3 : vector<1x128xf32> to vector<8x128xf32>
    %6 = arith.addf %4, %5 : vector<8x128xf32>
    %cst_5 = arith.constant 0.000000e+00 : f32
    %7 = vector.broadcast %cst_5 : f32 to vector<8x128xf32>
    %8 = arith.maximumf %6, %7 : vector<8x128xf32>
    %9 = arith.truncf %8 : vector<8x128xf32> to vector<8x128xbf16>
    %c0_6 = arith.constant 0 : index
    %c0_7 = arith.constant 0 : index
    %10 = vector.load %arg4[%c0_6, %c0_7] : memref<128x128xbf16, #tpu.memory_space<vmem>>, vector<128x128xbf16>
    %c0_8 = arith.constant 0 : index
    %c0_9 = arith.constant 0 : index
    %11 = vector.load %arg5[%c0_8, %c0_9] : memref<1x128xf32, #tpu.memory_space<vmem>>, vector<1x128xf32>
    %cst_10 = arith.constant dense<0.000000e+00> : vector<8x128xf32>
    %12 = tpu.matmul %9, %10, %cst_10 {dimension_numbers = #tpu.dot_dimension_numbers<[1], [0], [0], [1], [0, 0, 1, 1], [], []>} : vector<8x128xbf16>, vector<128x128xbf16>, vector<8x128xf32> -> vector<8x128xf32>
    %13 = vector.broadcast %11 : vector<1x128xf32> to vector<8x128xf32>
    %14 = arith.addf %12, %13 : vector<8x128xf32>
    %cst_11 = arith.constant 0.000000e+00 : f32
    %15 = vector.broadcast %cst_11 : f32 to vector<8x128xf32>
    %16 = arith.maximumf %14, %15 : vector<8x128xf32>
    %17 = arith.truncf %16 : vector<8x128xf32> to vector<8x128xbf16>
    %c0_12 = arith.constant 0 : index
    %c0_13 = arith.constant 0 : index
    %18 = vector.load %arg6[%c0_12, %c0_13] : memref<128x128xbf16, #tpu.memory_space<vmem>>, vector<128x128xbf16>
    %c0_14 = arith.constant 0 : index
    %c0_15 = arith.constant 0 : index
    %19 = vector.load %arg7[%c0_14, %c0_15] : memref<1x128xf32, #tpu.memory_space<vmem>>, vector<1x128xf32>
    %cst_16 = arith.constant dense<0.000000e+00> : vector<8x128xf32>
    %20 = tpu.matmul %17, %18, %cst_16 {dimension_numbers = #tpu.dot_dimension_numbers<[1], [0], [0], [1], [0, 0, 1, 1], [], []>} : vector<8x128xbf16>, vector<128x128xbf16>, vector<8x128xf32> -> vector<8x128xf32>
    %21 = vector.broadcast %19 : vector<1x128xf32> to vector<8x128xf32>
    %22 = arith.addf %20, %21 : vector<8x128xf32>
    %23 = arith.truncf %22 : vector<8x128xf32> to vector<8x128xbf16>
    %c0_17 = arith.constant 0 : index
    %c0_18 = arith.constant 0 : index
    %24 = vector.load %arg8[%c0_17, %c0_18] : memref<8x128xbf16, #tpu.memory_space<vmem>>, vector<8x128xbf16>
    tpu.vector_store %arg8[%c0_17, %c0_18], %23 {strides = array<i32>} : memref<8x128xbf16, #tpu.memory_space<vmem>>, vector<8x128xbf16>,
    return
  }
  func.func @transform_0(%arg0: i32) -> (i32, i32) {
    %c0_i32 = arith.constant 0 : i32
    %c0_i32_0 = arith.constant 0 : i32
    return %arg0, %c0_i32 : i32, i32
  }
  func.func @transform_1(%arg0: i32) -> (i32, i32) {
    %c0_i32 = arith.constant 0 : i32
    %c0_i32_0 = arith.constant 0 : i32
    %c0_i32_1 = arith.constant 0 : i32
    return %c0_i32, %c0_i32_0 : i32, i32
  }
  func.func @transform_2(%arg0: i32) -> (i32, i32) {
    %c0_i32 = arith.constant 0 : i32
    %c0_i32_0 = arith.constant 0 : i32
    %c0_i32_1 = arith.constant 0 : i32
    return %c0_i32, %c0_i32_0 : i32, i32
  }
  func.func @transform_3(%arg0: i32) -> (i32, i32) {
    %c0_i32 = arith.constant 0 : i32
    %c0_i32_0 = arith.constant 0 : i32
    %c0_i32_1 = arith.constant 0 : i32
    return %c0_i32, %c0_i32_0 : i32, i32
  }
  func.func @transform_4(%arg0: i32) -> (i32, i32) {
    %c0_i32 = arith.constant 0 : i32
    %c0_i32_0 = arith.constant 0 : i32
    %c0_i32_1 = arith.constant 0 : i32
    return %c0_i32, %c0_i32_0 : i32, i32
  }
  func.func @transform_5(%arg0: i32) -> (i32, i32) {
    %c0_i32 = arith.constant 0 : i32
    %c0_i32_0 = arith.constant 0 : i32
    %c0_i32_1 = arith.constant 0 : i32
    return %c0_i32, %c0_i32_0 : i32, i32
  }
  func.func @transform_6(%arg0: i32) -> (i32, i32) {
    %c0_i32 = arith.constant 0 : i32
    %c0_i32_0 = arith.constant 0 : i32
    %c0_i32_1 = arith.constant 0 : i32
    return %c0_i32, %c0_i32_0 : i32, i32
  }
  func.func @transform_7(%arg0: i32) -> (i32, i32) {
    %c0_i32 = arith.constant 0 : i32
    %c0_i32_0 = arith.constant 0 : i32
    return %arg0, %c0_i32 : i32, i32
  }
}

module attributes {stable_mosaic.version = 11 : i64} {
  func.func @_mlp_kernel(%arg0: i32, %arg1: memref<8x256xf32, #tpu.memory_space<vmem>>, %arg2: memref<256x128xbf16, #tpu.memory_space<vmem>>, %arg3: memref<1x128xf32, #tpu.memory_space<vmem>>, %arg4: memref<128x128xbf16, #tpu.memory_space<vmem>>, %arg5: memref<1x128xf32, #tpu.memory_space<vmem>>, %arg6: memref<128x128xbf16, #tpu.memory_space<vmem>>, %arg7: memref<1x128xf32, #tpu.memory_space<vmem>>, %arg8: memref<8x128xbf16, #tpu.memory_space<vmem>>) attributes {dimension_semantics = [#tpu.dimension_semantics<parallel>], iteration_bounds = array<i64: 1>, scalar_prefetch = 0 : i64, scratch_operands = 0 : i64, tpu.core_type = #tpu.core_type<tc>, window_params = [{transform_indices = @transform_0, window_bounds = array<i64: 8, 256>}, {pipeline_mode = #tpu.pipeline_mode<synchronous>, transform_indices = @transform_1, window_bounds = array<i64: 256, 128>}, {pipeline_mode = #tpu.pipeline_mode<synchronous>, transform_indices = @transform_2, window_bounds = array<i64: 1, 128>}, {pipeline_mode = #tpu.pipeline_mode<synchronous>, transform_indices = @transform_3, window_bounds = array<i64: 128, 128>}, {pipeline_mode = #tpu.pipeline_mode<synchronous>, transform_indices = @transform_4, window_bounds = array<i64: 1, 128>}, {pipeline_mode = #tpu.pipeline_mode<synchronous>, transform_indices = @transform_5, window_bounds = array<i64: 128, 128>}, {pipeline_mode = #tpu.pipeline_mode<synchronous>, transform_indices = @transform_6, window_bounds = array<i64: 1, 128>}, {transform_indices = @transform_7, window_bounds = array<i64: 8, 128>}]} {
    %c0 = arith.constant 0 : index
    %c0_0 = arith.constant 0 : index
    %0 = vector.load %arg1[%c0, %c0_0] : memref<8x256xf32, #tpu.memory_space<vmem>>, vector<8x256xf32>
    %1 = arith.truncf %0 : vector<8x256xf32> to vector<8x256xbf16>
    %c0_1 = arith.constant 0 : index
    %c0_2 = arith.constant 0 : index
    %2 = vector.load %arg2[%c0_1, %c0_2] : memref<256x128xbf16, #tpu.memory_space<vmem>>, vector<256x128xbf16>
    %c0_3 = arith.constant 0 : index
    %c0_4 = arith.constant 0 : index
    %3 = vector.load %arg3[%c0_3, %c0_4] : memref<1x128xf32, #tpu.memory_space<vmem>>, vector<1x128xf32>
    %cst = arith.constant dense<0.000000e+00> : vector<8x128xf32>
    %4 = tpu.matmul %1, %2, %cst {dimension_numbers = #tpu.dot_dimension_numbers<[1], [0], [0], [1], [0, 0, 1, 1], [], []>} : vector<8x256xbf16>, vector<256x128xbf16>, vector<8x128xf32> -> vector<8x128xf32>
    %5 = vector.broadcast %3 : vector<1x128xf32> to vector<8x128xf32>
    %6 = arith.addf %4, %5 : vector<8x128xf32>
    %cst_5 = arith.constant 0.000000e+00 : f32
    %7 = vector.broadcast %cst_5 : f32 to vector<8x128xf32>
    %8 = arith.maximumf %6, %7 : vector<8x128xf32>
    %9 = arith.truncf %8 : vector<8x128xf32> to vector<8x128xbf16>
    %c0_6 = arith.constant 0 : index
    %c0_7 = arith.constant 0 : index
    %10 = vector.load %arg4[%c0_6, %c0_7] : memref<128x128xbf16, #tpu.memory_space<vmem>>, vector<128x128xbf16>
    %c0_8 = arith.constant 0 : index
    %c0_9 = arith.constant 0 : index
    %11 = vector.load %arg5[%c0_8, %c0_9] : memref<1x128xf32, #tpu.memory_space<vmem>>, vector<1x128xf32>
    %cst_10 = arith.constant dense<0.000000e+00> : vector<8x128xf32>
    %12 = tpu.matmul %9, %10, %cst_10 {dimension_numbers = #tpu.dot_dimension_numbers<[1], [0], [0], [1], [0, 0, 1, 1], [], []>} : vector<8x128xbf16>, vector<128x128xbf16>, vector<8x128xf32> -> vector<8x128xf32>
    %13 = vector.broadcast %11 : vector<1x128xf32> to vector<8x128xf32>
    %14 = arith.addf %12, %13 : vector<8x128xf32>
    %cst_11 = arith.constant 0.000000e+00 : f32
    %15 = vector.broadcast %cst_11 : f32 to vector<8x128xf32>
    %16 = arith.maximumf %14, %15 : vector<8x128xf32>
    %17 = arith.truncf %16 : vector<8x128xf32> to vector<8x128xbf16>
    %c0_12 = arith.constant 0 : index
    %c0_13 = arith.constant 0 : index
    %18 = vector.load %arg6[%c0_12, %c0_13] : memref<128x128xbf16, #tpu.memory_space<vmem>>, vector<128x128xbf16>
    %c0_14 = arith.constant 0 : index
    %c0_15 = arith.constant 0 : index
    %19 = vector.load %arg7[%c0_14, %c0_15] : memref<1x128xf32, #tpu.memory_space<vmem>>, vector<1x128xf32>
    %cst_16 = arith.constant dense<0.000000e+00> : vector<8x128xf32>
    %20 = tpu.matmul %17, %18, %cst_16 {dimension_numbers = #tpu.dot_dimension_numbers<[1], [0], [0], [1], [0, 0, 1, 1], [], []>} : vector<8x128xbf16>, vector<128x128xbf16>, vector<8x128xf32> -> vector<8x128xf32>
    %21 = vector.broadcast %19 : vector<1x128xf32> to vector<8x128xf32>
    %22 = arith.addf %20, %21 : vector<8x128xf32>
    %23 = arith.truncf %22 : vector<8x128xf32> to vector<8x128xbf16>
    %c0_17 = arith.constant 0 : index
    %c0_18 = arith.constant 0 : index
    %24 = vector.load %arg8[%c0_17, %c0_18] : memref<8x128xbf16, #tpu.memory_space<vmem>>, vector<8x128xbf16>
    tpu.vector_store %arg8[%c0_17, %c0_18], %23 {strides = array<i32>} : memref<8x128xbf16, #tpu.memory_space<vmem>>, vector<8x128xbf16>,
    return
  }
  func.func @transform_0(%arg0: i32) -> (i32, i32) {
    %c0_i32 = arith.constant 0 : i32
    %c0_i32_0 = arith.constant 0 : i32
    return %arg0, %c0_i32 : i32, i32
  }
  func.func @transform_1(%arg0: i32) -> (i32, i32) {
    %c0_i32 = arith.constant 0 : i32
    %c0_i32_0 = arith.constant 0 : i32
    %c0_i32_1 = arith.constant 0 : i32
    return %c0_i32, %c0_i32_0 : i32, i32
  }
  func.func @transform_2(%arg0: i32) -> (i32, i32) {
    %c0_i32 = arith.constant 0 : i32
    %c0_i32_0 = arith.constant 0 : i32
    %c0_i32_1 = arith.constant 0 : i32
    return %c0_i32, %c0_i32_0 : i32, i32
  }
  func.func @transform_3(%arg0: i32) -> (i32, i32) {
    %c0_i32 = arith.constant 0 : i32
    %c0_i32_0 = arith.constant 0 : i32
    %c0_i32_1 = arith.constant 0 : i32
    return %c0_i32, %c0_i32_0 : i32, i32
  }
  func.func @transform_4(%arg0: i32) -> (i32, i32) {
    %c0_i32 = arith.constant 0 : i32
    %c0_i32_0 = arith.constant 0 : i32
    %c0_i32_1 = arith.constant 0 : i32
    return %c0_i32, %c0_i32_0 : i32, i32
  }
  func.func @transform_5(%arg0: i32) -> (i32, i32) {
    %c0_i32 = arith.constant 0 : i32
    %c0_i32_0 = arith.constant 0 : i32
    %c0_i32_1 = arith.constant 0 : i32
    return %c0_i32, %c0_i32_0 : i32, i32
  }
  func.func @transform_6(%arg0: i32) -> (i32, i32) {
    %c0_i32 = arith.constant 0 : i32
    %c0_i32_0 = arith.constant 0 : i32
    %c0_i32_1 = arith.constant 0 : i32
    return %c0_i32, %c0_i32_0 : i32, i32
  }
  func.func @transform_7(%arg0: i32) -> (i32, i32) {
    %c0_i32 = arith.constant 0 : i32
    %c0_i32_0 = arith.constant 0 : i32
    return %arg0, %c0_i32 : i32, i32
  }
}

</mosaic_0001>

<llo_original>
// kernel: _forward.1
$region0: #{_forward.1}
  #allocation0 [shape = 'u32[]', space=smem, size = 0x4, offset = 0x4, fixed_abs, tag = 'smem constant byte address 0x4 - core index']
  #allocation1 [shape = 'u32[144,128]{1,0:T(1,128)}', space=vmem, size = 0x12000, scoped, tag = 'internal scratch']
  %s0 = inlined_call_operand.vmem [shape: f32[8,256], index: 0, kind: input, shape index: {}]
  %s1 = inlined_call_operand.vmem [shape: bf16[256,128], index: 1, kind: input, shape index: {}]
  %s2 = inlined_call_operand.vmem [shape: f32[1,128], index: 2, kind: input, shape index: {}]
  %s3 = inlined_call_operand.hbm [shape: bf16[128,128], index: 3, kind: input, shape index: {}]
  %s4 = inlined_call_operand.vmem [shape: f32[1,128], index: 4, kind: input, shape index: {}]
  %s5 = inlined_call_operand.hbm [shape: bf16[128,128], index: 5, kind: input, shape index: {}]
  %s6 = inlined_call_operand.vmem [shape: f32[1,128], index: 6, kind: input, shape index: {}]
  %s7 = inlined_call_operand.vmem [shape: bf16[8,128], index: 7, kind: output, shape index: {}]
  %s8 = sld [smem:[#allocation0]]
  $region46: #{_forward.1} parent=0
    _
  %s10 = ssub.s32 1, %s8
  %s11 = scalar_select 0, %s10, %s8
  $region1: #{_forward.1} parent=0
    #allocation2 [shape = 'u8[32768]{0}', space=vmem, size = 0x8000, scoped, tag = 'input window, operand 3, single buffered']
    #allocation3 [shape = 's32[1]{0}', space=sflag, size = 0x4, scoped, tag = 'scoped memory for _forward.1']
    #allocation4 [shape = 'u8[32768]{0}', space=vmem, size = 0x8000, scoped, tag = 'input window, operand 5, single buffered']
    #allocation5 [shape = 's32[1]{0}', space=sflag, size = 0x4, scoped, tag = 'scoped memory for _forward.1']
    %12 = vsyncpa [#allocation3], 0
    %13 = vsyncpa [#allocation5], 0
    // Predicated region
    $region2: #{_forward.1} parent=1 // pred_check
      _
    $region3: #{_forward.1} parent=1 // pred_check_branch
      %15 = sbr.rel (0) target = $region5
    $region4: #{_forward.1} parent=1 // pred_region
      _
    $region5: #{_forward.1} parent=1 // pred_fallthru
      _
    // Predicated region
    $region6: #{_forward.1} parent=1 // pred_check
      _
    $region7: #{_forward.1} parent=1 // pred_check_branch
      %17 = sbr.rel (0) target = $region9
    $region8: #{_forward.1} parent=1 // pred_region
      _
    $region9: #{_forward.1} parent=1 // pred_fallthru
      _
    // Predicated region
    $region10: #{_forward.1} parent=1 // pred_check
      _
    $region11: #{_forward.1} parent=1 // pred_check_branch
      %19 = sbr.rel (0) target = $region13
    $region12: #{_forward.1} parent=1 // pred_region
      _
    $region13: #{_forward.1} parent=1 // pred_fallthru
      _
    // Predicated region
    $region14: #{_forward.1} parent=1 // pred_check
      _
    $region15: #{_forward.1} parent=1 // pred_check_branch
      %21 = sbr.rel (0) target = $region17
    $region16: #{_forward.1} parent=1 // pred_region
      %s23 = ssub.s32 1024, 1024
      %24 = vsyncadd [#allocation3], %s23
      %s25 = sshll.u32 [#allocation2], 4
      %s26 = int_to_ptr.vmem [resolvable:$true] %s25
      %31 = dma.hbm_to_vmem [thread:$0]  %s3, 1024, %s26, [#allocation3], 64, 64, 4
    $region17: #{_forward.1} parent=1 // pred_fallthru
      _
    // Predicated region
    $region18: #{_forward.1} parent=1 // pred_check
      _
    $region19: #{_forward.1} parent=1 // pred_check_branch
      %33 = sbr.rel (0) target = $region21
    $region20: #{_forward.1} parent=1 // pred_region
      _
    $region21: #{_forward.1} parent=1 // pred_fallthru
      _
    // Predicated region
    $region22: #{_forward.1} parent=1 // pred_check
      _
    $region23: #{_forward.1} parent=1 // pred_check_branch
      %35 = sbr.rel (0) target = $region25
    $region24: #{_forward.1} parent=1 // pred_region
      %s37 = ssub.s32 1024, 1024
      %38 = vsyncadd [#allocation5], %s37
      %s39 = sshll.u32 [#allocation4], 4
      %s40 = int_to_ptr.vmem [resolvable:$true] %s39
      %45 = dma.hbm_to_vmem [thread:$0]  %s5, 1024, %s40, [#allocation5], 64, 64, 4
    $region25: #{_forward.1} parent=1 // pred_fallthru
      _
    // Predicated region
    $region26: #{_forward.1} parent=1 // pred_check
      _
    $region27: #{_forward.1} parent=1 // pred_check_branch
      %47 = sbr.rel (0) target = $region29
    $region28: #{_forward.1} parent=1 // pred_region
      _
    $region29: #{_forward.1} parent=1 // pred_fallthru
      _
    // Predicated region
    $region30: #{_forward.1} parent=1 // pred_check
      _
    $region31: #{_forward.1} parent=1 // pred_check_branch
      %49 = sbr.rel (0) target = $region33
    $region32: #{_forward.1} parent=1 // pred_region
      %50 = dma.done [#allocation3], 1024
    $region33: #{_forward.1} parent=1 // pred_fallthru
      _
    // Predicated region
    $region34: #{_forward.1} parent=1 // pred_check
      _
    $region35: #{_forward.1} parent=1 // pred_check_branch
      %52 = sbr.rel (0) target = $region37
    $region36: #{_forward.1} parent=1 // pred_region
      %53 = dma.done [#allocation5], 1024
    $region37: #{_forward.1} parent=1 // pred_fallthru
      _
    %v55 = vld [vmem:[%s0] sm:$0xff]
    %v56 = vld [vmem:[%s0 + $0x8] sm:$0xff]
    %v57 = vpack.c.bf16 %v55, %v55
    %v58 = vpack.c.bf16 %v56, %v56
    %v59 = vld [vmem:[%s1] sm:$0xf]
    %v60 = vld [vmem:[%s1 + $0x4] sm:$0xf]
    %v61 = vld [vmem:[%s1 + $0x8] sm:$0xf]
    %v62 = vld [vmem:[%s1 + $0xc] sm:$0xf]
    %v63 = vld [vmem:[%s1 + $0x10] sm:$0xf]
    %v64 = vld [vmem:[%s1 + $0x14] sm:$0xf]
    %v65 = vld [vmem:[%s1 + $0x18] sm:$0xf]
    %v66 = vld [vmem:[%s1 + $0x1c] sm:$0xf]
    %v67 = vld [vmem:[%s1 + $0x20] sm:$0xf]
    %v68 = vld [vmem:[%s1 + $0x24] sm:$0xf]
    %v69 = vld [vmem:[%s1 + $0x28] sm:$0xf]
    %v70 = vld [vmem:[%s1 + $0x2c] sm:$0xf]
    %v71 = vld [vmem:[%s1 + $0x30] sm:$0xf]
    %v72 = vld [vmem:[%s1 + $0x34] sm:$0xf]
    %v73 = vld [vmem:[%s1 + $0x38] sm:$0xf]
    %v74 = vld [vmem:[%s1 + $0x3c] sm:$0xf]
    %v75 = vld [vmem:[%s1 + $0x40] sm:$0xf]
    %v76 = vld [vmem:[%s1 + $0x44] sm:$0xf]
    %v77 = vld [vmem:[%s1 + $0x48] sm:$0xf]
    %v78 = vld [vmem:[%s1 + $0x4c] sm:$0xf]
    %v79 = vld [vmem:[%s1 + $0x50] sm:$0xf]
    %v80 = vld [vmem:[%s1 + $0x54] sm:$0xf]
    %v81 = vld [vmem:[%s1 + $0x58] sm:$0xf]
    %v82 = vld [vmem:[%s1 + $0x5c] sm:$0xf]
    %v83 = vld [vmem:[%s1 + $0x60] sm:$0xf]
    %v84 = vld [vmem:[%s1 + $0x64] sm:$0xf]
    %v85 = vld [vmem:[%s1 + $0x68] sm:$0xf]
    %v86 = vld [vmem:[%s1 + $0x6c] sm:$0xf]
    %v87 = vld [vmem:[%s1 + $0x70] sm:$0xf]
    %v88 = vld [vmem:[%s1 + $0x74] sm:$0xf]
    %v89 = vld [vmem:[%s1 + $0x78] sm:$0xf]
    %v90 = vld [vmem:[%s1 + $0x7c] sm:$0xf]
    %v91 = vld [vmem:[%s2] sm:$0x1]
    %v93 = vlaneseq
    %v94 = vshrl.u32 %v93, 7
    %v95 = vsub.s32 0, %v94
    %v96 = vrot.slane %v91, %v95
    %v130 = vunpack.c.l.b16 %v59
    %v131 = vunpack.c.l.b16 %v60
    %v132 = vunpack.c.l.b16 %v61
    %v133 = vunpack.c.l.b16 %v62
    %v134 = vunpack.c.l.b16 %v63
    %v135 = vunpack.c.l.b16 %v64
    %v136 = vunpack.c.l.b16 %v65
    %v137 = vunpack.c.l.b16 %v66
    %v138 = vunpack.c.l.b16 %v67
    %v139 = vunpack.c.l.b16 %v68
    %v140 = vunpack.c.l.b16 %v69
    %v141 = vunpack.c.l.b16 %v70
    %v142 = vunpack.c.l.b16 %v71
    %v143 = vunpack.c.l.b16 %v72
    %v144 = vunpack.c.l.b16 %v73
    %v145 = vunpack.c.l.b16 %v74
    %v146 = vunpack.c.l.b16 %v75
    %v147 = vunpack.c.l.b16 %v76
    %v148 = vunpack.c.l.b16 %v77
    %v149 = vunpack.c.l.b16 %v78
    %v150 = vunpack.c.l.b16 %v79
    %v151 = vunpack.c.l.b16 %v80
    %v152 = vunpack.c.l.b16 %v81
    %v153 = vunpack.c.l.b16 %v82
    %v154 = vunpack.c.l.b16 %v83
    %v155 = vunpack.c.l.b16 %v84
    %v156 = vunpack.c.l.b16 %v85
    %v157 = vunpack.c.l.b16 %v86
    %v158 = vunpack.c.l.b16 %v87
    %v159 = vunpack.c.l.b16 %v88
    %v160 = vunpack.c.l.b16 %v89
    %v161 = vunpack.c.l.b16 %v90
    %v162 = vpack.c.b16 %v131, %v130
    %v163 = vpack.c.b16 %v133, %v132
    %v164 = vpack.c.b16 %v135, %v134
    %v165 = vpack.c.b16 %v137, %v136
    %v166 = vpack.c.b16 %v139, %v138
    %v167 = vpack.c.b16 %v141, %v140
    %v168 = vpack.c.b16 %v143, %v142
    %v169 = vpack.c.b16 %v145, %v144
    %v170 = vpack.c.b16 %v147, %v146
    %v171 = vpack.c.b16 %v149, %v148
    %v172 = vpack.c.b16 %v151, %v150
    %v173 = vpack.c.b16 %v153, %v152
    %v174 = vpack.c.b16 %v155, %v154
    %v175 = vpack.c.b16 %v157, %v156
    %v176 = vpack.c.b16 %v159, %v158
    %v177 = vpack.c.b16 %v161, %v160
    %194 = vmatprep.subr.bf16.mxu0 0
    %195 = vmatpush1.bf16.msra.mxu0 %v169
    %196 = vmatprep.subr.bf16.mxu0 0
    %197 = vmatpush1.bf16.msra.mxu0 %v168
    %198 = vmatprep.subr.bf16.mxu0 0
    %199 = vmatpush1.bf16.msra.mxu0 %v167
    %200 = vmatprep.subr.bf16.mxu0 0
    %201 = vmatpush1.bf16.msra.mxu0 %v166
    %202 = vmatprep.subr.bf16.mxu0 0
    %203 = vmatpush1.bf16.msra.mxu0 %v165
    %204 = vmatprep.subr.bf16.mxu0 0
    %205 = vmatpush1.bf16.msra.mxu0 %v164
    %206 = vmatprep.subr.bf16.mxu0 0
    %207 = vmatpush1.bf16.msra.mxu0 %v163
    %208 = vmatprep.subr.bf16.mxu0 0
    %209 = vmatpush1.bf16.msra.mxu0 %v162
    %210 = vmatprep.subr.bf16.mxu0 0
    %211 = vmatpush2.bf16.msra.mxu0 %v177
    %212 = vmatprep.subr.bf16.mxu0 0
    %213 = vmatpush2.bf16.msra.mxu0 %v176
    %214 = vmatprep.subr.bf16.mxu0 0
    %215 = vmatpush2.bf16.msra.mxu0 %v175
    %216 = vmatprep.subr.bf16.mxu0 0
    %217 = vmatpush2.bf16.msra.mxu0 %v174
    %218 = vmatprep.subr.bf16.mxu0 0
    %219 = vmatpush2.bf16.msra.mxu0 %v173
    %220 = vmatprep.subr.bf16.mxu0 0
    %221 = vmatpush2.bf16.msra.mxu0 %v172
    %222 = vmatprep.subr.bf16.mxu0 0
    %223 = vmatpush2.bf16.msra.mxu0 %v171
    %224 = vmatprep.subr.bf16.mxu0 0
    %225 = vmatpush2.bf16.msra.mxu0 %v170
    %226 = vmatprep.mubr.bf16.mxu0 %v58
    %227 = vmatmul.mubr.bf16.gmra.mxu0 %v57
    %v228 = vpop.f32.mrf.mxu0
    %v229 = vadd.f32 %v96, %v228
    %v230 = vpop.f32.mrf.mxu0
    %v231 = vpop.f32.mrf.mxu0
    %v232 = vpop.f32.mrf.mxu0
    %233 = vdwg.mxu0
    %v234 = vmax.f32 %v229, 0.0
    %v235 = vpack.c.bf16 %v234, %v234
    %v236 = vld [vmem:[#allocation2] sm:$0xf]
    %v237 = vld [vmem:[#allocation2 + $0x4] sm:$0xf]
    %v238 = vld [vmem:[#allocation2 + $0x8] sm:$0xf]
    %v239 = vld [vmem:[#allocation2 + $0xc] sm:$0xf]
    %v240 = vld [vmem:[#allocation2 + $0x10] sm:$0xf]
    %v241 = vld [vmem:[#allocation2 + $0x14] sm:$0xf]
    %v242 = vld [vmem:[#allocation2 + $0x18] sm:$0xf]
    %v243 = vld [vmem:[#allocation2 + $0x1c] sm:$0xf]
    %v244 = vld [vmem:[#allocation2 + $0x20] sm:$0xf]
    %v245 = vld [vmem:[#allocation2 + $0x24] sm:$0xf]
    %v246 = vld [vmem:[#allocation2 + $0x28] sm:$0xf]
    %v247 = vld [vmem:[#allocation2 + $0x2c] sm:$0xf]
    %v248 = vld [vmem:[#allocation2 + $0x30] sm:$0xf]
    %v249 = vld [vmem:[#allocation2 + $0x34] sm:$0xf]
    %v250 = vld [vmem:[#allocation2 + $0x38] sm:$0xf]
    %v251 = vld [vmem:[#allocation2 + $0x3c] sm:$0xf]
    %v252 = vld [vmem:[%s4] sm:$0x1]
    %v254 = vlaneseq
    %v255 = vshrl.u32 %v254, 7
    %v256 = vsub.s32 0, %v255
    %v257 = vrot.slane %v252, %v256
    %v275 = vunpack.c.l.b16 %v236
    %v276 = vunpack.c.l.b16 %v237
    %v277 = vunpack.c.l.b16 %v238
    %v278 = vunpack.c.l.b16 %v239
    %v279 = vunpack.c.l.b16 %v240
    %v280 = vunpack.c.l.b16 %v241
    %v281 = vunpack.c.l.b16 %v242
    %v282 = vunpack.c.l.b16 %v243
    %v283 = vunpack.c.l.b16 %v244
    %v284 = vunpack.c.l.b16 %v245
    %v285 = vunpack.c.l.b16 %v246
    %v286 = vunpack.c.l.b16 %v247
    %v287 = vunpack.c.l.b16 %v248
    %v288 = vunpack.c.l.b16 %v249
    %v289 = vunpack.c.l.b16 %v250
    %v290 = vunpack.c.l.b16 %v251
    %v291 = vpack.c.b16 %v276, %v275
    %v292 = vpack.c.b16 %v278, %v277
    %v293 = vpack.c.b16 %v280, %v279
    %v294 = vpack.c.b16 %v282, %v281
    %v295 = vpack.c.b16 %v284, %v283
    %v296 = vpack.c.b16 %v286, %v285
    %v297 = vpack.c.b16 %v288, %v287
    %v298 = vpack.c.b16 %v290, %v289
    %307 = vmatprep.subr.bf16.mxu0 0
    %308 = vmatpush1.bf16.msra.mxu0 %v298
    %309 = vmatprep.subr.bf16.mxu0 0
    %310 = vmatpush1.bf16.msra.mxu0 %v297
    %311 = vmatprep.subr.bf16.mxu0 0
    %312 = vmatpush1.bf16.msra.mxu0 %v296
    %313 = vmatprep.subr.bf16.mxu0 0
    %314 = vmatpush1.bf16.msra.mxu0 %v295
    %315 = vmatprep.subr.bf16.mxu0 0
    %316 = vmatpush1.bf16.msra.mxu0 %v294
    %317 = vmatprep.subr.bf16.mxu0 0
    %318 = vmatpush1.bf16.msra.mxu0 %v293
    %319 = vmatprep.subr.bf16.mxu0 0
    %320 = vmatpush1.bf16.msra.mxu0 %v292
    %321 = vmatprep.subr.bf16.mxu0 0
    %322 = vmatpush1.bf16.msra.mxu0 %v291
    %323 = vmatprep.subr.bf16.mxu0 0
    %324 = vmatpush2.bf16.msra.mxu0 0
    %325 = vmatprep.subr.bf16.mxu0 0
    %326 = vmatpush2.bf16.msra.mxu0 0
    %327 = vmatprep.subr.bf16.mxu0 0
    %328 = vmatpush2.bf16.msra.mxu0 0
    %329 = vmatprep.subr.bf16.mxu0 0
    %330 = vmatpush2.bf16.msra.mxu0 0
    %331 = vmatprep.subr.bf16.mxu0 0
    %332 = vmatpush2.bf16.msra.mxu0 0
    %333 = vmatprep.subr.bf16.mxu0 0
    %334 = vmatpush2.bf16.msra.mxu0 0
    %335 = vmatprep.subr.bf16.mxu0 0
    %336 = vmatpush2.bf16.msra.mxu0 0
    %337 = vmatprep.subr.bf16.mxu0 0
    %338 = vmatpush2.bf16.msra.mxu0 0
    %339 = vmatprep.mubr.bf16.mxu0 0
    %340 = vmatmul.mubr.bf16.gmra.mxu0 %v235
    %v341 = vpop.f32.mrf.mxu0
    %v342 = vadd.f32 %v257, %v341
    %v343 = vpop.f32.mrf.mxu0
    %v344 = vpop.f32.mrf.mxu0
    %v345 = vpop.f32.mrf.mxu0
    %346 = vdwg.mxu0
    %v347 = vmax.f32 %v342, 0.0
    %v348 = vpack.c.bf16 %v347, %v347
    %v349 = vld [vmem:[#allocation4] sm:$0xf]
    %v350 = vld [vmem:[#allocation4 + $0x4] sm:$0xf]
    %v351 = vld [vmem:[#allocation4 + $0x8] sm:$0xf]
    %v352 = vld [vmem:[#allocation4 + $0xc] sm:$0xf]
    %v353 = vld [vmem:[#allocation4 + $0x10] sm:$0xf]
    %v354 = vld [vmem:[#allocation4 + $0x14] sm:$0xf]
    %v355 = vld [vmem:[#allocation4 + $0x18] sm:$0xf]
    %v356 = vld [vmem:[#allocation4 + $0x1c] sm:$0xf]
    %v357 = vld [vmem:[#allocation4 + $0x20] sm:$0xf]
    %v358 = vld [vmem:[#allocation4 + $0x24] sm:$0xf]
    %v359 = vld [vmem:[#allocation4 + $0x28] sm:$0xf]
    %v360 = vld [vmem:[#allocation4 + $0x2c] sm:$0xf]
    %v361 = vld [vmem:[#allocation4 + $0x30] sm:$0xf]
    %v362 = vld [vmem:[#allocation4 + $0x34] sm:$0xf]
    %v363 = vld [vmem:[#allocation4 + $0x38] sm:$0xf]
    %v364 = vld [vmem:[#allocation4 + $0x3c] sm:$0xf]
    %v365 = vld [vmem:[%s6] sm:$0x1]
    %v367 = vlaneseq
    %v368 = vshrl.u32 %v367, 7
    %v369 = vsub.s32 0, %v368
    %v370 = vrot.slane %v365, %v369
    %v388 = vunpack.c.l.b16 %v349
    %v389 = vunpack.c.l.b16 %v350
    %v390 = vunpack.c.l.b16 %v351
    %v391 = vunpack.c.l.b16 %v352
    %v392 = vunpack.c.l.b16 %v353
    %v393 = vunpack.c.l.b16 %v354
    %v394 = vunpack.c.l.b16 %v355
    %v395 = vunpack.c.l.b16 %v356
    %v396 = vunpack.c.l.b16 %v357
    %v397 = vunpack.c.l.b16 %v358
    %v398 = vunpack.c.l.b16 %v359
    %v399 = vunpack.c.l.b16 %v360
    %v400 = vunpack.c.l.b16 %v361
    %v401 = vunpack.c.l.b16 %v362
    %v402 = vunpack.c.l.b16 %v363
    %v403 = vunpack.c.l.b16 %v364
    %v404 = vpack.c.b16 %v389, %v388
    %v405 = vpack.c.b16 %v391, %v390
    %v406 = vpack.c.b16 %v393, %v392
    %v407 = vpack.c.b16 %v395, %v394
    %v408 = vpack.c.b16 %v397, %v396
    %v409 = vpack.c.b16 %v399, %v398
    %v410 = vpack.c.b16 %v401, %v400
    %v411 = vpack.c.b16 %v403, %v402
    %420 = vmatprep.subr.bf16.mxu0 0
    %421 = vmatpush1.bf16.msra.mxu0 %v411
    %422 = vmatprep.subr.bf16.mxu0 0
    %423 = vmatpush1.bf16.msra.mxu0 %v410
    %424 = vmatprep.subr.bf16.mxu0 0
    %425 = vmatpush1.bf16.msra.mxu0 %v409
    %426 = vmatprep.subr.bf16.mxu0 0
    %427 = vmatpush1.bf16.msra.mxu0 %v408
    %428 = vmatprep.subr.bf16.mxu0 0
    %429 = vmatpush1.bf16.msra.mxu0 %v407
    %430 = vmatprep.subr.bf16.mxu0 0
    %431 = vmatpush1.bf16.msra.mxu0 %v406
    %432 = vmatprep.subr.bf16.mxu0 0
    %433 = vmatpush1.bf16.msra.mxu0 %v405
    %434 = vmatprep.subr.bf16.mxu0 0
    %435 = vmatpush1.bf16.msra.mxu0 %v404
    %436 = vmatprep.subr.bf16.mxu0 0
    %437 = vmatpush2.bf16.msra.mxu0 0
    %438 = vmatprep.subr.bf16.mxu0 0
    %439 = vmatpush2.bf16.msra.mxu0 0
    %440 = vmatprep.subr.bf16.mxu0 0
    %441 = vmatpush2.bf16.msra.mxu0 0
    %442 = vmatprep.subr.bf16.mxu0 0
    %443 = vmatpush2.bf16.msra.mxu0 0
    %444 = vmatprep.subr.bf16.mxu0 0
    %445 = vmatpush2.bf16.msra.mxu0 0
    %446 = vmatprep.subr.bf16.mxu0 0
    %447 = vmatpush2.bf16.msra.mxu0 0
    %448 = vmatprep.subr.bf16.mxu0 0
    %449 = vmatpush2.bf16.msra.mxu0 0
    %450 = vmatprep.subr.bf16.mxu0 0
    %451 = vmatpush2.bf16.msra.mxu0 0
    %452 = vmatprep.mubr.bf16.mxu0 0
    %453 = vmatmul.mubr.bf16.gmra.mxu0 %v348
    %v454 = vpop.f32.mrf.mxu0
    %v455 = vadd.f32 %v370, %v454
    %v456 = vpop.f32.mrf.mxu0
    %v457 = vpop.f32.mrf.mxu0
    %v458 = vpop.f32.mrf.mxu0
    %459 = vdwg.mxu0
    %v460 = vpack.c.bf16 %v455, %v455
    %461 = vst [vmem:[%s7] sm:$0xf] %v460
    // Predicated region
    $region38: #{_forward.1} parent=1 // pred_check
      _
    $region39: #{_forward.1} parent=1 // pred_check_branch
      %463 = sbr.rel (0) target = $region41
    $region40: #{_forward.1} parent=1 // pred_region
      _
    $region41: #{_forward.1} parent=1 // pred_fallthru
      _
    // Predicated region
    $region42: #{_forward.1} parent=1 // pred_check
      _
    $region43: #{_forward.1} parent=1 // pred_check_branch
      %465 = sbr.rel (0) target = $region45
    $region44: #{_forward.1} parent=1 // pred_region
      _
    $region45: #{_forward.1} parent=1 // pred_fallthru
      _
    %466 = vsyncpa [#allocation3], 1
    %467 = vsyncpa [#allocation5], 1

// kernel: _forward.1
$region0: #{_forward.1}
  #allocation0 [shape = 'u32[]', space=smem, size = 0x4, offset = 0x4, fixed_abs, tag = 'smem constant byte address 0x4 - core index']
  #allocation1 [shape = 'u32[144,128]{1,0:T(1,128)}', space=vmem, size = 0x12000, scoped, tag = 'internal scratch']
  %s0 = inlined_call_operand.vmem [shape: f32[8,256], index: 0, kind: input, shape index: {}]
  %s1 = inlined_call_operand.vmem [shape: bf16[256,128], index: 1, kind: input, shape index: {}]
  %s2 = inlined_call_operand.vmem [shape: f32[1,128], index: 2, kind: input, shape index: {}]
  %s3 = inlined_call_operand.hbm [shape: bf16[128,128], index: 3, kind: input, shape index: {}]
  %s4 = inlined_call_operand.vmem [shape: f32[1,128], index: 4, kind: input, shape index: {}]
  %s5 = inlined_call_operand.hbm [shape: bf16[128,128], index: 5, kind: input, shape index: {}]
  %s6 = inlined_call_operand.vmem [shape: f32[1,128], index: 6, kind: input, shape index: {}]
  %s7 = inlined_call_operand.vmem [shape: bf16[8,128], index: 7, kind: output, shape index: {}]
  %s8 = sld [smem:[#allocation0]]
  $region46: #{_forward.1} parent=0
    _
  %s10 = ssub.s32 1, %s8
  %s11 = scalar_select 0, %s10, %s8
  $region1: #{_forward.1} parent=0
    #allocation2 [shape = 'u8[32768]{0}', space=vmem, size = 0x8000, scoped, tag = 'input window, operand 3, single buffered']
    #allocation3 [shape = 's32[1]{0}', space=sflag, size = 0x4, scoped, tag = 'scoped memory for _forward.1']
    #allocation4 [shape = 'u8[32768]{0}', space=vmem, size = 0x8000, scoped, tag = 'input window, operand 5, single buffered']
    #allocation5 [shape = 's32[1]{0}', space=sflag, size = 0x4, scoped, tag = 'scoped memory for _forward.1']
    %12 = vsyncpa [#allocation3], 0
    %13 = vsyncpa [#allocation5], 0
    // Predicated region
    $region2: #{_forward.1} parent=1 // pred_check
      _
    $region3: #{_forward.1} parent=1 // pred_check_branch
      %15 = sbr.rel (0) target = $region5
    $region4: #{_forward.1} parent=1 // pred_region
      _
    $region5: #{_forward.1} parent=1 // pred_fallthru
      _
    // Predicated region
    $region6: #{_forward.1} parent=1 // pred_check
      _
    $region7: #{_forward.1} parent=1 // pred_check_branch
      %17 = sbr.rel (0) target = $region9
    $region8: #{_forward.1} parent=1 // pred_region
      _
    $region9: #{_forward.1} parent=1 // pred_fallthru
      _
    // Predicated region
    $region10: #{_forward.1} parent=1 // pred_check
      _
    $region11: #{_forward.1} parent=1 // pred_check_branch
      %19 = sbr.rel (0) target = $region13
    $region12: #{_forward.1} parent=1 // pred_region
      _
    $region13: #{_forward.1} parent=1 // pred_fallthru
      _
    // Predicated region
    $region14: #{_forward.1} parent=1 // pred_check
      _
    $region15: #{_forward.1} parent=1 // pred_check_branch
      %21 = sbr.rel (0) target = $region17
    $region16: #{_forward.1} parent=1 // pred_region
      %s23 = ssub.s32 1024, 1024
      %24 = vsyncadd [#allocation3], %s23
      %s25 = sshll.u32 [#allocation2], 4
      %s26 = int_to_ptr.vmem [resolvable:$true] %s25
      %31 = dma.hbm_to_vmem [thread:$0]  %s3, 1024, %s26, [#allocation3], 64, 64, 4
    $region17: #{_forward.1} parent=1 // pred_fallthru
      _
    // Predicated region
    $region18: #{_forward.1} parent=1 // pred_check
      _
    $region19: #{_forward.1} parent=1 // pred_check_branch
      %33 = sbr.rel (0) target = $region21
    $region20: #{_forward.1} parent=1 // pred_region
      _
    $region21: #{_forward.1} parent=1 // pred_fallthru
      _
    // Predicated region
    $region22: #{_forward.1} parent=1 // pred_check
      _
    $region23: #{_forward.1} parent=1 // pred_check_branch
      %35 = sbr.rel (0) target = $region25
    $region24: #{_forward.1} parent=1 // pred_region
      %s37 = ssub.s32 1024, 1024
      %38 = vsyncadd [#allocation5], %s37
      %s39 = sshll.u32 [#allocation4], 4
      %s40 = int_to_ptr.vmem [resolvable:$true] %s39
      %45 = dma.hbm_to_vmem [thread:$0]  %s5, 1024, %s40, [#allocation5], 64, 64, 4
    $region25: #{_forward.1} parent=1 // pred_fallthru
      _
    // Predicated region
    $region26: #{_forward.1} parent=1 // pred_check
      _
    $region27: #{_forward.1} parent=1 // pred_check_branch
      %47 = sbr.rel (0) target = $region29
    $region28: #{_forward.1} parent=1 // pred_region
      _
    $region29: #{_forward.1} parent=1 // pred_fallthru
      _
    // Predicated region
    $region30: #{_forward.1} parent=1 // pred_check
      _
    $region31: #{_forward.1} parent=1 // pred_check_branch
      %49 = sbr.rel (0) target = $region33
    $region32: #{_forward.1} parent=1 // pred_region
      %50 = dma.done [#allocation3], 1024
    $region33: #{_forward.1} parent=1 // pred_fallthru
      _
    // Predicated region
    $region34: #{_forward.1} parent=1 // pred_check
      _
    $region35: #{_forward.1} parent=1 // pred_check_branch
      %52 = sbr.rel (0) target = $region37
    $region36: #{_forward.1} parent=1 // pred_region
      %53 = dma.done [#allocation5], 1024
    $region37: #{_forward.1} parent=1 // pred_fallthru
      _
    %v55 = vld [vmem:[%s0] sm:$0xff]
    %v56 = vld [vmem:[%s0 + $0x8] sm:$0xff]
    %v57 = vpack.c.bf16 %v55, %v55
    %v58 = vpack.c.bf16 %v56, %v56
    %v59 = vld [vmem:[%s1] sm:$0xf]
    %v60 = vld [vmem:[%s1 + $0x4] sm:$0xf]
    %v61 = vld [vmem:[%s1 + $0x8] sm:$0xf]
    %v62 = vld [vmem:[%s1 + $0xc] sm:$0xf]
    %v63 = vld [vmem:[%s1 + $0x10] sm:$0xf]
    %v64 = vld [vmem:[%s1 + $0x14] sm:$0xf]
    %v65 = vld [vmem:[%s1 + $0x18] sm:$0xf]
    %v66 = vld [vmem:[%s1 + $0x1c] sm:$0xf]
    %v67 = vld [vmem:[%s1 + $0x20] sm:$0xf]
    %v68 = vld [vmem:[%s1 + $0x24] sm:$0xf]
    %v69 = vld [vmem:[%s1 + $0x28] sm:$0xf]
    %v70 = vld [vmem:[%s1 + $0x2c] sm:$0xf]
    %v71 = vld [vmem:[%s1 + $0x30] sm:$0xf]
    %v72 = vld [vmem:[%s1 + $0x34] sm:$0xf]
    %v73 = vld [vmem:[%s1 + $0x38] sm:$0xf]
    %v74 = vld [vmem:[%s1 + $0x3c] sm:$0xf]
    %v75 = vld [vmem:[%s1 + $0x40] sm:$0xf]
    %v76 = vld [vmem:[%s1 + $0x44] sm:$0xf]
    %v77 = vld [vmem:[%s1 + $0x48] sm:$0xf]
    %v78 = vld [vmem:[%s1 + $0x4c] sm:$0xf]
    %v79 = vld [vmem:[%s1 + $0x50] sm:$0xf]
    %v80 = vld [vmem:[%s1 + $0x54] sm:$0xf]
    %v81 = vld [vmem:[%s1 + $0x58] sm:$0xf]
    %v82 = vld [vmem:[%s1 + $0x5c] sm:$0xf]
    %v83 = vld [vmem:[%s1 + $0x60] sm:$0xf]
    %v84 = vld [vmem:[%s1 + $0x64] sm:$0xf]
    %v85 = vld [vmem:[%s1 + $0x68] sm:$0xf]
    %v86 = vld [vmem:[%s1 + $0x6c] sm:$0xf]
    %v87 = vld [vmem:[%s1 + $0x70] sm:$0xf]
    %v88 = vld [vmem:[%s1 + $0x74] sm:$0xf]
    %v89 = vld [vmem:[%s1 + $0x78] sm:$0xf]
    %v90 = vld [vmem:[%s1 + $0x7c] sm:$0xf]
    %v91 = vld [vmem:[%s2] sm:$0x1]
    %v93 = vlaneseq
    %v94 = vshrl.u32 %v93, 7
    %v95 = vsub.s32 0, %v94
    %v96 = vrot.slane %v91, %v95
    %v130 = vunpack.c.l.b16 %v59
    %v131 = vunpack.c.l.b16 %v60
    %v132 = vunpack.c.l.b16 %v61
    %v133 = vunpack.c.l.b16 %v62
    %v134 = vunpack.c.l.b16 %v63
    %v135 = vunpack.c.l.b16 %v64
    %v136 = vunpack.c.l.b16 %v65
    %v137 = vunpack.c.l.b16 %v66
    %v138 = vunpack.c.l.b16 %v67
    %v139 = vunpack.c.l.b16 %v68
    %v140 = vunpack.c.l.b16 %v69
    %v141 = vunpack.c.l.b16 %v70
    %v142 = vunpack.c.l.b16 %v71
    %v143 = vunpack.c.l.b16 %v72
    %v144 = vunpack.c.l.b16 %v73
    %v145 = vunpack.c.l.b16 %v74
    %v146 = vunpack.c.l.b16 %v75
    %v147 = vunpack.c.l.b16 %v76
    %v148 = vunpack.c.l.b16 %v77
    %v149 = vunpack.c.l.b16 %v78
    %v150 = vunpack.c.l.b16 %v79
    %v151 = vunpack.c.l.b16 %v80
    %v152 = vunpack.c.l.b16 %v81
    %v153 = vunpack.c.l.b16 %v82
    %v154 = vunpack.c.l.b16 %v83
    %v155 = vunpack.c.l.b16 %v84
    %v156 = vunpack.c.l.b16 %v85
    %v157 = vunpack.c.l.b16 %v86
    %v158 = vunpack.c.l.b16 %v87
    %v159 = vunpack.c.l.b16 %v88
    %v160 = vunpack.c.l.b16 %v89
    %v161 = vunpack.c.l.b16 %v90
    %v162 = vpack.c.b16 %v131, %v130
    %v163 = vpack.c.b16 %v133, %v132
    %v164 = vpack.c.b16 %v135, %v134
    %v165 = vpack.c.b16 %v137, %v136
    %v166 = vpack.c.b16 %v139, %v138
    %v167 = vpack.c.b16 %v141, %v140
    %v168 = vpack.c.b16 %v143, %v142
    %v169 = vpack.c.b16 %v145, %v144
    %v170 = vpack.c.b16 %v147, %v146
    %v171 = vpack.c.b16 %v149, %v148
    %v172 = vpack.c.b16 %v151, %v150
    %v173 = vpack.c.b16 %v153, %v152
    %v174 = vpack.c.b16 %v155, %v154
    %v175 = vpack.c.b16 %v157, %v156
    %v176 = vpack.c.b16 %v159, %v158
    %v177 = vpack.c.b16 %v161, %v160
    %194 = vmatprep.subr.bf16.mxu0 0
    %195 = vmatpush1.bf16.msra.mxu0 %v169
    %196 = vmatprep.subr.bf16.mxu0 0
    %197 = vmatpush1.bf16.msra.mxu0 %v168
    %198 = vmatprep.subr.bf16.mxu0 0
    %199 = vmatpush1.bf16.msra.mxu0 %v167
    %200 = vmatprep.subr.bf16.mxu0 0
    %201 = vmatpush1.bf16.msra.mxu0 %v166
    %202 = vmatprep.subr.bf16.mxu0 0
    %203 = vmatpush1.bf16.msra.mxu0 %v165
    %204 = vmatprep.subr.bf16.mxu0 0
    %205 = vmatpush1.bf16.msra.mxu0 %v164
    %206 = vmatprep.subr.bf16.mxu0 0
    %207 = vmatpush1.bf16.msra.mxu0 %v163
    %208 = vmatprep.subr.bf16.mxu0 0
    %209 = vmatpush1.bf16.msra.mxu0 %v162
    %210 = vmatprep.subr.bf16.mxu0 0
    %211 = vmatpush2.bf16.msra.mxu0 %v177
    %212 = vmatprep.subr.bf16.mxu0 0
    %213 = vmatpush2.bf16.msra.mxu0 %v176
    %214 = vmatprep.subr.bf16.mxu0 0
    %215 = vmatpush2.bf16.msra.mxu0 %v175
    %216 = vmatprep.subr.bf16.mxu0 0
    %217 = vmatpush2.bf16.msra.mxu0 %v174
    %218 = vmatprep.subr.bf16.mxu0 0
    %219 = vmatpush2.bf16.msra.mxu0 %v173
    %220 = vmatprep.subr.bf16.mxu0 0
    %221 = vmatpush2.bf16.msra.mxu0 %v172
    %222 = vmatprep.subr.bf16.mxu0 0
    %223 = vmatpush2.bf16.msra.mxu0 %v171
    %224 = vmatprep.subr.bf16.mxu0 0
    %225 = vmatpush2.bf16.msra.mxu0 %v170
    %226 = vmatprep.mubr.bf16.mxu0 %v58
    %227 = vmatmul.mubr.bf16.gmra.mxu0 %v57
    %v228 = vpop.f32.mrf.mxu0
    %v229 = vadd.f32 %v96, %v228
    %v230 = vpop.f32.mrf.mxu0
    %v231 = vpop.f32.mrf.mxu0
    %v232 = vpop.f32.mrf.mxu0
    %233 = vdwg.mxu0
    %v234 = vmax.f32 %v229, 0.0
    %v235 = vpack.c.bf16 %v234, %v234
    %v236 = vld [vmem:[#allocation2] sm:$0xf]
    %v237 = vld [vmem:[#allocation2 + $0x4] sm:$0xf]
    %v238 = vld [vmem:[#allocation2 + $0x8] sm:$0xf]
    %v239 = vld [vmem:[#allocation2 + $0xc] sm:$0xf]
    %v240 = vld [vmem:[#allocation2 + $0x10] sm:$0xf]
    %v241 = vld [vmem:[#allocation2 + $0x14] sm:$0xf]
    %v242 = vld [vmem:[#allocation2 + $0x18] sm:$0xf]
    %v243 = vld [vmem:[#allocation2 + $0x1c] sm:$0xf]
    %v244 = vld [vmem:[#allocation2 + $0x20] sm:$0xf]
    %v245 = vld [vmem:[#allocation2 + $0x24] sm:$0xf]
    %v246 = vld [vmem:[#allocation2 + $0x28] sm:$0xf]
    %v247 = vld [vmem:[#allocation2 + $0x2c] sm:$0xf]
    %v248 = vld [vmem:[#allocation2 + $0x30] sm:$0xf]
    %v249 = vld [vmem:[#allocation2 + $0x34] sm:$0xf]
    %v250 = vld [vmem:[#allocation2 + $0x38] sm:$0xf]
    %v251 = vld [vmem:[#allocation2 + $0x3c] sm:$0xf]
    %v252 = vld [vmem:[%s4] sm:$0x1]
    %v254 = vlaneseq
    %v255 = vshrl.u32 %v254, 7
    %v256 = vsub.s32 0, %v255
    %v257 = vrot.slane %v252, %v256
    %v275 = vunpack.c.l.b16 %v236
    %v276 = vunpack.c.l.b16 %v237
    %v277 = vunpack.c.l.b16 %v238
    %v278 = vunpack.c.l.b16 %v239
    %v279 = vunpack.c.l.b16 %v240
    %v280 = vunpack.c.l.b16 %v241
    %v281 = vunpack.c.l.b16 %v242
    %v282 = vunpack.c.l.b16 %v243
    %v283 = vunpack.c.l.b16 %v244
    %v284 = vunpack.c.l.b16 %v245
    %v285 = vunpack.c.l.b16 %v246
    %v286 = vunpack.c.l.b16 %v247
    %v287 = vunpack.c.l.b16 %v248
    %v288 = vunpack.c.l.b16 %v249
    %v289 = vunpack.c.l.b16 %v250
    %v290 = vunpack.c.l.b16 %v251
    %v291 = vpack.c.b16 %v276, %v275
    %v292 = vpack.c.b16 %v278, %v277
    %v293 = vpack.c.b16 %v280, %v279
    %v294 = vpack.c.b16 %v282, %v281
    %v295 = vpack.c.b16 %v284, %v283
    %v296 = vpack.c.b16 %v286, %v285
    %v297 = vpack.c.b16 %v288, %v287
    %v298 = vpack.c.b16 %v290, %v289
    %307 = vmatprep.subr.bf16.mxu0 0
    %308 = vmatpush1.bf16.msra.mxu0 %v298
    %309 = vmatprep.subr.bf16.mxu0 0
    %310 = vmatpush1.bf16.msra.mxu0 %v297
    %311 = vmatprep.subr.bf16.mxu0 0
    %312 = vmatpush1.bf16.msra.mxu0 %v296
    %313 = vmatprep.subr.bf16.mxu0 0
    %314 = vmatpush1.bf16.msra.mxu0 %v295
    %315 = vmatprep.subr.bf16.mxu0 0
    %316 = vmatpush1.bf16.msra.mxu0 %v294
    %317 = vmatprep.subr.bf16.mxu0 0
    %318 = vmatpush1.bf16.msra.mxu0 %v293
    %319 = vmatprep.subr.bf16.mxu0 0
    %320 = vmatpush1.bf16.msra.mxu0 %v292
    %321 = vmatprep.subr.bf16.mxu0 0
    %322 = vmatpush1.bf16.msra.mxu0 %v291
    %323 = vmatprep.subr.bf16.mxu0 0
    %324 = vmatpush2.bf16.msra.mxu0 0
    %325 = vmatprep.subr.bf16.mxu0 0
    %326 = vmatpush2.bf16.msra.mxu0 0
    %327 = vmatprep.subr.bf16.mxu0 0
    %328 = vmatpush2.bf16.msra.mxu0 0
    %329 = vmatprep.subr.bf16.mxu0 0
    %330 = vmatpush2.bf16.msra.mxu0 0
    %331 = vmatprep.subr.bf16.mxu0 0
    %332 = vmatpush2.bf16.msra.mxu0 0
    %333 = vmatprep.subr.bf16.mxu0 0
    %334 = vmatpush2.bf16.msra.mxu0 0
    %335 = vmatprep.subr.bf16.mxu0 0
    %336 = vmatpush2.bf16.msra.mxu0 0
    %337 = vmatprep.subr.bf16.mxu0 0
    %338 = vmatpush2.bf16.msra.mxu0 0
    %339 = vmatprep.mubr.bf16.mxu0 0
    %340 = vmatmul.mubr.bf16.gmra.mxu0 %v235
    %v341 = vpop.f32.mrf.mxu0
    %v342 = vadd.f32 %v257, %v341
    %v343 = vpop.f32.mrf.mxu0
    %v344 = vpop.f32.mrf.mxu0
    %v345 = vpop.f32.mrf.mxu0
    %346 = vdwg.mxu0
    %v347 = vmax.f32 %v342, 0.0
    %v348 = vpack.c.bf16 %v347, %v347
    %v349 = vld [vmem:[#allocation4] sm:$0xf]
    %v350 = vld [vmem:[#allocation4 + $0x4] sm:$0xf]
    %v351 = vld [vmem:[#allocation4 + $0x8] sm:$0xf]
    %v352 = vld [vmem:[#allocation4 + $0xc] sm:$0xf]
    %v353 = vld [vmem:[#allocation4 + $0x10] sm:$0xf]
    %v354 = vld [vmem:[#allocation4 + $0x14] sm:$0xf]
    %v355 = vld [vmem:[#allocation4 + $0x18] sm:$0xf]
    %v356 = vld [vmem:[#allocation4 + $0x1c] sm:$0xf]
    %v357 = vld [vmem:[#allocation4 + $0x20] sm:$0xf]
    %v358 = vld [vmem:[#allocation4 + $0x24] sm:$0xf]
    %v359 = vld [vmem:[#allocation4 + $0x28] sm:$0xf]
    %v360 = vld [vmem:[#allocation4 + $0x2c] sm:$0xf]
    %v361 = vld [vmem:[#allocation4 + $0x30] sm:$0xf]
    %v362 = vld [vmem:[#allocation4 + $0x34] sm:$0xf]
    %v363 = vld [vmem:[#allocation4 + $0x38] sm:$0xf]
    %v364 = vld [vmem:[#allocation4 + $0x3c] sm:$0xf]
    %v365 = vld [vmem:[%s6] sm:$0x1]
    %v367 = vlaneseq
    %v368 = vshrl.u32 %v367, 7
    %v369 = vsub.s32 0, %v368
    %v370 = vrot.slane %v365, %v369
    %v388 = vunpack.c.l.b16 %v349
    %v389 = vunpack.c.l.b16 %v350
    %v390 = vunpack.c.l.b16 %v351
    %v391 = vunpack.c.l.b16 %v352
    %v392 = vunpack.c.l.b16 %v353
    %v393 = vunpack.c.l.b16 %v354
    %v394 = vunpack.c.l.b16 %v355
    %v395 = vunpack.c.l.b16 %v356
    %v396 = vunpack.c.l.b16 %v357
    %v397 = vunpack.c.l.b16 %v358
    %v398 = vunpack.c.l.b16 %v359
    %v399 = vunpack.c.l.b16 %v360
    %v400 = vunpack.c.l.b16 %v361
    %v401 = vunpack.c.l.b16 %v362
    %v402 = vunpack.c.l.b16 %v363
    %v403 = vunpack.c.l.b16 %v364
    %v404 = vpack.c.b16 %v389, %v388
    %v405 = vpack.c.b16 %v391, %v390
    %v406 = vpack.c.b16 %v393, %v392
    %v407 = vpack.c.b16 %v395, %v394
    %v408 = vpack.c.b16 %v397, %v396
    %v409 = vpack.c.b16 %v399, %v398
    %v410 = vpack.c.b16 %v401, %v400
    %v411 = vpack.c.b16 %v403, %v402
    %420 = vmatprep.subr.bf16.mxu0 0
    %421 = vmatpush1.bf16.msra.mxu0 %v411
    %422 = vmatprep.subr.bf16.mxu0 0
    %423 = vmatpush1.bf16.msra.mxu0 %v410
    %424 = vmatprep.subr.bf16.mxu0 0
    %425 = vmatpush1.bf16.msra.mxu0 %v409
    %426 = vmatprep.subr.bf16.mxu0 0
    %427 = vmatpush1.bf16.msra.mxu0 %v408
    %428 = vmatprep.subr.bf16.mxu0 0
    %429 = vmatpush1.bf16.msra.mxu0 %v407
    %430 = vmatprep.subr.bf16.mxu0 0
    %431 = vmatpush1.bf16.msra.mxu0 %v406
    %432 = vmatprep.subr.bf16.mxu0 0
    %433 = vmatpush1.bf16.msra.mxu0 %v405
    %434 = vmatprep.subr.bf16.mxu0 0
    %435 = vmatpush1.bf16.msra.mxu0 %v404
    %436 = vmatprep.subr.bf16.mxu0 0
    %437 = vmatpush2.bf16.msra.mxu0 0
    %438 = vmatprep.subr.bf16.mxu0 0
    %439 = vmatpush2.bf16.msra.mxu0 0
    %440 = vmatprep.subr.bf16.mxu0 0
    %441 = vmatpush2.bf16.msra.mxu0 0
    %442 = vmatprep.subr.bf16.mxu0 0
    %443 = vmatpush2.bf16.msra.mxu0 0
    %444 = vmatprep.subr.bf16.mxu0 0
    %445 = vmatpush2.bf16.msra.mxu0 0
    %446 = vmatprep.subr.bf16.mxu0 0
    %447 = vmatpush2.bf16.msra.mxu0 0
    %448 = vmatprep.subr.bf16.mxu0 0
    %449 = vmatpush2.bf16.msra.mxu0 0
    %450 = vmatprep.subr.bf16.mxu0 0
    %451 = vmatpush2.bf16.msra.mxu0 0
    %452 = vmatprep.mubr.bf16.mxu0 0
    %453 = vmatmul.mubr.bf16.gmra.mxu0 %v348
    %v454 = vpop.f32.mrf.mxu0
    %v455 = vadd.f32 %v370, %v454
    %v456 = vpop.f32.mrf.mxu0
    %v457 = vpop.f32.mrf.mxu0
    %v458 = vpop.f32.mrf.mxu0
    %459 = vdwg.mxu0
    %v460 = vpack.c.bf16 %v455, %v455
    %461 = vst [vmem:[%s7] sm:$0xf] %v460
    // Predicated region
    $region38: #{_forward.1} parent=1 // pred_check
      _
    $region39: #{_forward.1} parent=1 // pred_check_branch
      %463 = sbr.rel (0) target = $region41
    $region40: #{_forward.1} parent=1 // pred_region
      _
    $region41: #{_forward.1} parent=1 // pred_fallthru
      _
    // Predicated region
    $region42: #{_forward.1} parent=1 // pred_check
      _
    $region43: #{_forward.1} parent=1 // pred_check_branch
      %465 = sbr.rel (0) target = $region45
    $region44: #{_forward.1} parent=1 // pred_region
      _
    $region45: #{_forward.1} parent=1 // pred_fallthru
      _
    %466 = vsyncpa [#allocation3], 1
    %467 = vsyncpa [#allocation5], 1

</llo_original>
